<compile_context>
chip_gen: v5e
topology: v5e:2x2
jax: 0.10.0
libtpu: 0.0.40
codegen_flags: <defaults>
</compile_context>

<pallas_src>
import math

import jax
import jax.numpy as jnp
from jax.experimental import pallas as pl
from jax.experimental.pallas import tpu as pltpu

D_HID = 768            # fc0 output width
D_OUT = 256            # fc1 output width (2 * 128 lanes -> lane-dense output tiles)
_MIN_GRID_STEPS = 2    # >= 2 so v7x's two TensorCores both get grid steps


def _round_up(x, m):
    return ((x + m - 1) // m) * m


def _vmem_limit_bytes(tm, K, N, x_bytes, w_bytes, out_bytes):
    # Double-buffered x / out tiles + (small) double-buffered weights/bias,
    # plus the f32 accumulator before the final cast and some compiler headroom.
    need = 2 * (tm * K * x_bytes + tm * N * out_bytes + K * N * w_bytes + N * 4)
    need += tm * N * 4
    need = int(need * 1.25) + (2 << 20)
    return max(8 << 20, min(need, 32 << 20))


# --------------------------------------------------------------------------------------
# Kernel
# --------------------------------------------------------------------------------------
def _linear_kernel(x_ref, w_ref, b_ref, o_ref):
    # One (tm, N) output tile per grid step: o = x_tile @ W + b.
    x = x_ref[...].astype(w_ref.dtype)          # no-op if caller already supplies bf16
    y = jnp.dot(x, w_ref[...], preferred_element_type=jnp.float32)   # MXU, f32 acc
    o_ref[...] = (y + b_ref[...]).astype(o_ref.dtype)                # f32 bias add (VPU)


# --------------------------------------------------------------------------------------
# Wrapper
# --------------------------------------------------------------------------------------
def pallas_linear(x2d, w, b, *, out_dtype=jnp.float32, tm=1024):
    """y = x2d @ w + b with x2d: (M, K), w: (K, N) bf16, b: (1, N) f32 -> (M, N)."""
    M, K = x2d.shape
    Kw, N = w.shape
    assert K == Kw and b.shape == (1, N)
    assert N % 128 == 0, "output feature dim must be lane-dense (multiple of 128)"

    # Sublane-aligned row tile, capped so the grid has >= _MIN_GRID_STEPS steps
    # (keeps both v7x TensorCores busy and lets the pipeline overlap DMA/compute).
    tm = max(8, min(tm, _round_up(pl.cdiv(M, _MIN_GRID_STEPS), 8)))
    grid = (pl.cdiv(M, tm),)                    # partial last tile handled by Pallas

    x_bytes = x2d.dtype.itemsize
    w_bytes = w.dtype.itemsize
    o_bytes = jnp.dtype(out_dtype).itemsize

    # NOTE: weights/bias use a constant index_map and stay resident; pl.Buffered(1)
    # could single-buffer them, but the saving (<0.5 MiB) only matters at very large tm.
    return pl.pallas_call(
        _linear_kernel,
        out_shape=jax.ShapeDtypeStruct((M, N), out_dtype),
        grid_spec=pltpu.PrefetchScalarGridSpec(
            num_scalar_prefetch=0,
            grid=grid,
            in_specs=[
                pl.BlockSpec((tm, K), lambda i: (i, 0)),   # x row tile (streams)
                pl.BlockSpec((K, N), lambda i: (0, 0)),    # W (resident)
                pl.BlockSpec((1, N), lambda i: (0, 0)),    # b (resident)
            ],
            out_specs=pl.BlockSpec((tm, N), lambda i: (i, 0)),
        ),
        compiler_params=pltpu.CompilerParams(
            dimension_semantics=("parallel",),
            vmem_limit_bytes=_vmem_limit_bytes(tm, K, N, x_bytes, w_bytes, o_bytes),
        ),
        cost_estimate=pl.CostEstimate(
            flops=2 * M * K * N,
            transcendentals=0,
            bytes_accessed=x_bytes * M * K + o_bytes * M * N + w_bytes * K * N + 4 * N),
    )(x2d, w, b)


# --------------------------------------------------------------------------------------
# Module port
# --------------------------------------------------------------------------------------
class CLIPAdapterPallas:
    """JAX/Pallas port of the PyTorch CLIPAdapter module (no nonlinearity)."""

    def __init__(self, input_dim, key, *, compute_dtype=jnp.bfloat16,
                 out_dtype=jnp.float32):
        self.input_dim = input_dim
        self.compute_dtype = compute_dtype
        self.out_dtype = out_dtype

        k0, k1, k2, k3 = jax.random.split(key, 4)
        # PyTorch nn.Linear default init: U(-1/sqrt(fan_in), 1/sqrt(fan_in)).
        lim0 = 1.0 / math.sqrt(input_dim)
        lim1 = 1.0 / math.sqrt(D_HID)
        # f32 reference parameters, stored (in, out) so the kernel computes x @ W.
        self.w0 = jax.random.uniform(k0, (input_dim, D_HID), jnp.float32, -lim0, lim0)
        self.b0 = jax.random.uniform(k1, (1, D_HID), jnp.float32, -lim0, lim0)
        self.w1 = jax.random.uniform(k2, (D_HID, D_OUT), jnp.float32, -lim1, lim1)
        self.b1 = jax.random.uniform(k3, (1, D_OUT), jnp.float32, -lim1, lim1)

        # Fold fc0+fc1 (no nonlinearity between them in the reference module):
        #   (x @ W0 + b0) @ W1 + b1 == x @ (W0 @ W1) + (b0 @ W1 + b1)
        # Fold in f32, then cast the effective weight to the MXU-native dtype.
        w_eff = self.w0 @ self.w1                       # (input_dim, 256) f32
        self.b_eff = self.b0 @ self.w1 + self.b1        # (1, 256) f32
        self.w_eff_c = w_eff.astype(compute_dtype)      # bf16 MXU input
        self.w1_c = self.w1.astype(compute_dtype)       # for the D == 768 path

    def __call__(self, x, *, out_dtype=None):
        # x: (B, S, D). The PyTorch `if x.size(2) != 768` branch is a static-shape
        # check, resolved here at trace time. x keeps its caller dtype (f32 or bf16);
        # no wrapper-side cast is inserted.
        out_dtype = self.out_dtype if out_dtype is None else out_dtype
        B, S, D = x.shape
        x2d = x.reshape(B * S, D)
        if D != D_HID:
            assert D == self.input_dim
            y2d = pallas_linear(x2d, self.w_eff_c, self.b_eff, out_dtype=out_dtype)
        else:
            y2d = pallas_linear(x2d, self.w1_c, self.b1, out_dtype=out_dtype)
        return y2d.reshape(B, S, D_OUT)


# --------------------------------------------------------------------------------------
# Self-test
# --------------------------------------------------------------------------------------
if __name__ == "__main__":
    key = jax.random.PRNGKey(0)
    k_param, k_x1, k_x2, k_x3 = jax.random.split(key, 4)

    input_dim = 32
    adapter = CLIPAdapterPallas(input_dim, k_param)
    fwd = jax.jit(adapter.__call__)
    fwd_bf16 = jax.jit(lambda x: adapter(x, out_dtype=jnp.bfloat16))

    def ref_fwd(x):  # plain-JAX f32 reference matching the PyTorch forward (two stages)
        B, S, D = x.shape
        h = x.reshape(B * S, D).astype(jnp.float32)
        if D != D_HID:
            h = h @ adapter.w0 + adapter.b0
        y = h @ adapter.w1 + adapter.b1
        return y.reshape(B, S, D_OUT)

    # Tolerance accounts for bf16 matmul inputs / folded bf16 weights with f32 accum.
    TOL = dict(atol=5e-2, rtol=5e-2)

    # 1) Small shape consistent with the module: (batch=2, seq=8, input_dim=32).
    x_small = jax.random.normal(k_x1, (2, 8, input_dim), jnp.float32)
    out = fwd(x_small)
    jax.block_until_ready(out)
    assert out.shape == (2, 8, D_OUT) and out.dtype == jnp.float32
    assert jnp.allclose(out, ref_fwd(x_small), **TOL)

    # 2) M = 600 rows: exercises the min-grid-steps cap and a partial last tile.
    x_big = jax.random.normal(k_x2, (2, 300, input_dim), jnp.float32)
    out_big = fwd(x_big)
    jax.block_until_ready(out_big)
    assert out_big.shape == (2, 300, D_OUT)
    assert jnp.allclose(out_big, ref_fwd(x_big), **TOL)

    # 3) 768-wide input skips fc0 (the `if x.size(2) != 768` branch, unfolded W1 path).
    x_768 = jax.random.normal(k_x3, (2, 8, D_HID), jnp.float32)
    out_768 = fwd(x_768)
    jax.block_until_ready(out_768)
    assert out_768.shape == (2, 8, D_OUT)
    assert jnp.allclose(out_768, ref_fwd(x_768), **TOL)

    # 4) bf16 activations in + bf16 out (halved HBM traffic path).
    out_bf16 = fwd_bf16(x_small.astype(jnp.bfloat16))
    jax.block_until_ready(out_bf16)
    assert out_bf16.shape == (2, 8, D_OUT) and out_bf16.dtype == jnp.bfloat16
    assert jnp.allclose(out_bf16.astype(jnp.float32), ref_fwd(x_small),
                        atol=1e-1, rtol=1e-1)

    print("KERNEL_OK")
</pallas_src>

<mosaic_0001>
module attributes {stable_mosaic.version = 11 : i64} {
  func.func @_linear_kernel(%arg0: i32, %arg1: memref<8x32xf32, #tpu.memory_space<vmem>>, %arg2: memref<32x256xbf16, #tpu.memory_space<vmem>>, %arg3: memref<1x256xf32, #tpu.memory_space<vmem>>, %arg4: memref<8x256xf32, #tpu.memory_space<vmem>>) attributes {dimension_semantics = [#tpu.dimension_semantics<parallel>], iteration_bounds = array<i64: 2>, scalar_prefetch = 0 : i64, scratch_operands = 0 : i64, tpu.core_type = #tpu.core_type<tc>, window_params = [{transform_indices = @transform_0, window_bounds = array<i64: 8, 32>}, {pipeline_mode = #tpu.pipeline_mode<synchronous>, transform_indices = @transform_1, window_bounds = array<i64: 32, 256>}, {pipeline_mode = #tpu.pipeline_mode<synchronous>, transform_indices = @transform_2, window_bounds = array<i64: 1, 256>}, {transform_indices = @transform_3, window_bounds = array<i64: 8, 256>}]} {
    %c0 = arith.constant 0 : index
    %c0_0 = arith.constant 0 : index
    %0 = vector.load %arg1[%c0, %c0_0] : memref<8x32xf32, #tpu.memory_space<vmem>>, vector<8x32xf32>
    %1 = arith.truncf %0 : vector<8x32xf32> to vector<8x32xbf16>
    %c0_1 = arith.constant 0 : index
    %c0_2 = arith.constant 0 : index
    %2 = vector.load %arg2[%c0_1, %c0_2] : memref<32x256xbf16, #tpu.memory_space<vmem>>, vector<32x256xbf16>
    %cst = arith.constant dense<0.000000e+00> : vector<8x256xf32>
    %3 = tpu.matmul %1, %2, %cst {dimension_numbers = #tpu.dot_dimension_numbers<[1], [0], [0], [1], [0, 0, 1, 1], [], []>} : vector<8x32xbf16>, vector<32x256xbf16>, vector<8x256xf32> -> vector<8x256xf32>
    %c0_3 = arith.constant 0 : index
    %c0_4 = arith.constant 0 : index
    %4 = vector.load %arg3[%c0_3, %c0_4] : memref<1x256xf32, #tpu.memory_space<vmem>>, vector<1x256xf32>
    %5 = vector.broadcast %4 : vector<1x256xf32> to vector<8x256xf32>
    %6 = arith.addf %3, %5 : vector<8x256xf32>
    %c0_5 = arith.constant 0 : index
    %c0_6 = arith.constant 0 : index
    %7 = vector.load %arg4[%c0_5, %c0_6] : memref<8x256xf32, #tpu.memory_space<vmem>>, vector<8x256xf32>
    tpu.vector_store %arg4[%c0_5, %c0_6], %6 {strides = array<i32>} : memref<8x256xf32, #tpu.memory_space<vmem>>, vector<8x256xf32>,
    return
  }
  func.func @transform_0(%arg0: i32) -> (i32, i32) {
    %c0_i32 = arith.constant 0 : i32
    %c0_i32_0 = arith.constant 0 : i32
    return %arg0, %c0_i32 : i32, i32
  }
  func.func @transform_1(%arg0: i32) -> (i32, i32) {
    %c0_i32 = arith.constant 0 : i32
    %c0_i32_0 = arith.constant 0 : i32
    %c0_i32_1 = arith.constant 0 : i32
    return %c0_i32, %c0_i32_0 : i32, i32
  }
  func.func @transform_2(%arg0: i32) -> (i32, i32) {
    %c0_i32 = arith.constant 0 : i32
    %c0_i32_0 = arith.constant 0 : i32
    %c0_i32_1 = arith.constant 0 : i32
    return %c0_i32, %c0_i32_0 : i32, i32
  }
  func.func @transform_3(%arg0: i32) -> (i32, i32) {
    %c0_i32 = arith.constant 0 : i32
    %c0_i32_0 = arith.constant 0 : i32
    return %arg0, %c0_i32 : i32, i32
  }
}

</mosaic_0001>

<llo_original>
// kernel: a_call__.1
$region0: #{a_call__.1}
  #allocation0 [shape = 'u32[]', space=smem, size = 0x4, offset = 0x4, fixed_abs, tag = 'smem constant byte address 0x4 - core index']
  #allocation1 [shape = 'u32[72,128]{1,0:T(1,128)}', space=vmem, size = 0x9000, scoped, tag = 'internal scratch']
  %s0 = inlined_call_operand.hbm [shape: f32[16,32], index: 0, kind: input, shape index: {}]
  %s1 = inlined_call_operand.hbm [shape: bf16[32,256], index: 1, kind: input, shape index: {}]
  %s2 = inlined_call_operand.vmem [shape: f32[1,256], index: 2, kind: input, shape index: {}]
  %s3 = inlined_call_operand.hbm [shape: f32[16,256], index: 3, kind: output, shape index: {}]
  %s4 = sld [smem:[#allocation0]]
  $region53: #{a_call__.1} parent=0
    _
  %s6 = ssub.s32 1, %s4
  %s7 = scalar_select 0, %s6, %s4
  $region1: #{a_call__.1} parent=0
    #allocation2 [shape = 'u8[8192]{0}', space=vmem, size = 0x2000, scoped, tag = 'input window, operand 0']
    #allocation3 [shape = 's32[2]{0}', space=sflag, size = 0x8, scoped, tag = 'scoped memory for a_call__.1']
    #allocation4 [shape = 's32[2]{0}', space=sflag, size = 0x8, scoped, tag = 'scoped memory for a_call__.1']
    #allocation5 [shape = 'u8[16384]{0}', space=vmem, size = 0x4000, scoped, tag = 'input window, operand 1, single buffered']
    #allocation6 [shape = 's32[1]{0}', space=sflag, size = 0x4, scoped, tag = 'scoped memory for a_call__.1']
    #allocation7 [shape = 'u8[16384]{0}', space=vmem, size = 0x4000, scoped, tag = 'output window, operand 0']
    %8 = vsyncpa [#allocation3], 0
    %s9 = scalar_lea.sflag [#allocation3], 1
    %10 = vsyncpa %s9, 0
    %11 = vsyncpa [#allocation6], 0
    %12 = vsyncpa [#allocation4], 0
    %s13 = scalar_lea.sflag [#allocation4], 1
    %14 = vsyncpa %s13, 0
    loop: start=0, step=1, limit=4
    $region2: #{a_call__.1} parent=1 // loop_pre_header
      _
    $region3: #{a_call__.1} parent=1 // loop_header
      %s16 = sphi 0, %s20
      %p17 = scmp.ge.s32.totalorder %s16, 4
      %s26 = sphi 0, %s28
      %s29 = sphi 0, %s26
      %s30 = sphi 0, %s29
      %s46 = sphi 0, %s30
      %s50 = sphi 0, %s50
      %s52 = sphi 0, %s50
      %s53 = sphi 0, %s52
      %s67 = sphi 0, %s53
      %s71 = sphi 0, %s71
      %s73 = sphi 0, %s71
      %s74 = sphi 0, %s73
      %s88 = sphi 0, %s74
      %s94 = sphi 0, %s96
      %s97 = sphi 0, %s94
      %s98 = sphi 0, %s97
      %s114 = sphi 0, %s98
    $region4: #{a_call__.1} parent=1 // loop_header_branch
      %19 = sbr.rel (%p17) target = $region8
    $region5: #{a_call__.1} parent=1 // loop_body
      %s21 = ssub.s32 %s16, 1
      %s22 = ssub.s32 %s16, 2
      %s23 = sadd.s32 %s16, 1
      %s24 = ssub.s32 %s16, %s23
      %p25 = scmp.eq.s32.totalorder %s24, 0
      %s27 = sadd.s32 %s26, 1
      %s28 = scalar_select %p25, %s26, %s27
      %p31 = pneg %p25
      %p32 = scmp.eq.s32.totalorder %s16, 1
      %p33 = por %p31, %p32
      %p34 = scmp.ne.s32.totalorder %s26, %s29
      %p35 = scmp.eq.s32.totalorder %s16, 0
      %p36 = por %p34, %p35
      %p37 = scmp.ne.s32.totalorder %s26, %s29
      %p38 = scmp.eq.s32.totalorder %s21, 1
      %p39 = por %p37, %p38
      %p40 = scmp.ne.s32.totalorder %s29, %s30
      %p41 = scmp.eq.s32.totalorder %s21, 0
      %p42 = por %p40, %p41
      %p43 = scmp.ne.s32.totalorder %s29, %s30
      %p44 = scmp.eq.s32.totalorder %s22, 1
      %p45 = por %p43, %p44
      %p47 = scmp.ne.s32.totalorder %s30, %s46
      %p48 = scmp.eq.s32.totalorder %s22, 0
      %p49 = por %p47, %p48
      %s51 = sadd.s32 %s50, 1
      %p54 = scmp.eq.s32.totalorder %s16, 1
      %p55 = scmp.ne.s32.totalorder %s50, %s52
      %p56 = scmp.eq.s32.totalorder %s16, 0
      %p57 = por %p55, %p56
      %p58 = scmp.ne.s32.totalorder %s50, %s52
      %p59 = scmp.eq.s32.totalorder %s21, 1
      %p60 = por %p58, %p59
      %p61 = scmp.ne.s32.totalorder %s52, %s53
      %p62 = scmp.eq.s32.totalorder %s21, 0
      %p63 = por %p61, %p62
      %p64 = scmp.ne.s32.totalorder %s52, %s53
      %p65 = scmp.eq.s32.totalorder %s22, 1
      %p66 = por %p64, %p65
      %p68 = scmp.ne.s32.totalorder %s53, %s67
      %p69 = scmp.eq.s32.totalorder %s22, 0
      %p70 = por %p68, %p69
      %s72 = sadd.s32 %s71, 1
      %p75 = scmp.eq.s32.totalorder %s16, 1
      %p76 = scmp.ne.s32.totalorder %s71, %s73
      %p77 = scmp.eq.s32.totalorder %s16, 0
      %p78 = por %p76, %p77
      %p79 = scmp.ne.s32.totalorder %s71, %s73
      %p80 = scmp.eq.s32.totalorder %s21, 1
      %p81 = por %p79, %p80
      %p82 = scmp.ne.s32.totalorder %s73, %s74
      %p83 = scmp.eq.s32.totalorder %s21, 0
      %p84 = por %p82, %p83
      %p85 = scmp.ne.s32.totalorder %s73, %s74
      %p86 = scmp.eq.s32.totalorder %s22, 1
      %p87 = por %p85, %p86
      %p89 = scmp.ne.s32.totalorder %s74, %s88
      %p90 = scmp.eq.s32.totalorder %s22, 0
      %p91 = por %p89, %p90
      %s92 = ssub.s32 %s16, %s23
      %p93 = scmp.eq.s32.totalorder %s92, 0
      %s95 = sadd.s32 %s94, 1
      %s96 = scalar_select %p93, %s94, %s95
      %p99 = pneg %p93
      %p100 = scmp.eq.s32.totalorder %s16, 1
      %p101 = por %p99, %p100
      %p102 = scmp.ne.s32.totalorder %s94, %s97
      %p103 = scmp.eq.s32.totalorder %s16, 0
      %p104 = por %p102, %p103
      %p105 = scmp.ne.s32.totalorder %s94, %s97
      %p106 = scmp.eq.s32.totalorder %s21, 1
      %p107 = por %p105, %p106
      %p108 = scmp.ne.s32.totalorder %s97, %s98
      %p109 = scmp.eq.s32.totalorder %s21, 0
      %p110 = por %p108, %p109
      %p111 = scmp.ne.s32.totalorder %s97, %s98
      %p112 = scmp.eq.s32.totalorder %s22, 1
      %p113 = por %p111, %p112
      %p115 = scmp.ne.s32.totalorder %s98, %s114
      %p116 = scmp.eq.s32.totalorder %s22, 0
      %p117 = por %p115, %p116
      %p118 = scmp.le.s32.totalorder 1, %s16
      %p119 = scmp.lt.s32.totalorder %s16, 3
      %p120 = pnand %p118, %p119
      %p121 = pneg %p120
      // Predicated region
      $region9: #{a_call__.1} parent=5 // pred_check
        _
      $region10: #{a_call__.1} parent=5 // pred_check_branch
        %123 = sbr.rel (%p120) target = $region12
      $region11: #{a_call__.1} parent=5 // pred_region
        %s124 = ssub.s32 %s16, 1
        // Predicated region
        $region13: #{a_call__.1} parent=11 // pred_check
          %p125 = pneg %p63
        $region14: #{a_call__.1} parent=11 // pred_check_branch
          %127 = sbr.rel (%p125) target = $region16
        $region15: #{a_call__.1} parent=11 // pred_region
          %129 = vsyncadd [#allocation6], 0
          %s130 = sshll.u32 %s1, 4
          %s131 = int_to_ptr.hbm [resolvable:$true] %s130
          %s132 = sshll.u32 [#allocation5], 4
          %s133 = int_to_ptr.vmem [resolvable:$true] %s132
          %138 = dma.hbm_to_vmem [thread:$0]  %s131, 512, %s133, [#allocation6], 128, 128, 8
        $region16: #{a_call__.1} parent=11 // pred_fallthru
          _
        // Predicated region
        $region17: #{a_call__.1} parent=11 // pred_check
          %p139 = pneg %p84
        $region18: #{a_call__.1} parent=11 // pred_check_branch
          %141 = sbr.rel (%p139) target = $region20
        $region19: #{a_call__.1} parent=11 // pred_region
          _
        $region20: #{a_call__.1} parent=11 // pred_fallthru
          _
      $region12: #{a_call__.1} parent=5 // pred_fallthru
        _
      %p142 = scmp.lt.s32.totalorder %s16, 2
      // Predicated region
      $region21: #{a_call__.1} parent=5 // pred_check
        %p143 = pneg %p142
      $region22: #{a_call__.1} parent=5 // pred_check_branch
        %145 = sbr.rel (%p143) target = $region24
      $region23: #{a_call__.1} parent=5 // pred_region
        // Predicated region
        $region25: #{a_call__.1} parent=23 // pred_check
          %p146 = pneg %p36
        $region26: #{a_call__.1} parent=23 // pred_check_branch
          %148 = sbr.rel (%p146) target = $region28
        $region27: #{a_call__.1} parent=23 // pred_region
          %s149 = sand.u32 %s26, 1
          %s150 = scalar_lea.sflag [#allocation3], %s149
          %s151 = sand.u32 %s26, 1
          %s152 = smul.addr %s151, 8
          %s153 = scalar_lea.vmem [#allocation2], %s152
          %155 = vsyncadd %s150, 0
          %s156 = smul.addr %s16, 8
          %s157 = scalar_lea.hbm %s0, %s156
          %s159 = sshll.u32 %s157, 4
          %s160 = int_to_ptr.hbm [resolvable:$true] %s159
          %s161 = sshll.u32 %s153, 4
          %s162 = int_to_ptr.vmem [resolvable:$true] %s161
          %164 = dma.hbm_to_vmem [thread:$0]  %s160, 128, %s162, %s150
        $region28: #{a_call__.1} parent=23 // pred_fallthru
          _
      $region24: #{a_call__.1} parent=5 // pred_fallthru
        _
      %p165 = scmp.le.s32.totalorder 1, %s16
      %p166 = scmp.lt.s32.totalorder %s16, 3
      %p167 = pnand %p165, %p166
      %p168 = pneg %p167
      // Predicated region
      $region29: #{a_call__.1} parent=5 // pred_check
        _
      $region30: #{a_call__.1} parent=5 // pred_check_branch
        %170 = sbr.rel (%p167) target = $region32
      $region31: #{a_call__.1} parent=5 // pred_region
        %s171 = ssub.s32 %s16, 1
        %s172 = sand.u32 %s29, 1
        %s173 = scalar_lea.sflag [#allocation3], %s172
        %s174 = sand.u32 %s29, 1
        %s175 = smul.addr %s174, 8
        %s176 = scalar_lea.vmem [#allocation2], %s175
        // Predicated region
        $region33: #{a_call__.1} parent=31 // pred_check
          %p177 = pneg %p42
        $region34: #{a_call__.1} parent=31 // pred_check_branch
          %179 = sbr.rel (%p177) target = $region36
        $region35: #{a_call__.1} parent=31 // pred_region
          %181 = dma.done %s173, 128
        $region36: #{a_call__.1} parent=31 // pred_fallthru
          _
        // Predicated region
        $region37: #{a_call__.1} parent=31 // pred_check
          %p182 = pneg %p63
        $region38: #{a_call__.1} parent=31 // pred_check_branch
          %184 = sbr.rel (%p182) target = $region40
        $region39: #{a_call__.1} parent=31 // pred_region
          %186 = dma.done [#allocation6], 512
        $region40: #{a_call__.1} parent=31 // pred_fallthru
          _
        %s187 = sand.u32 %s29, 1
        %s188 = scalar_lea.sflag [#allocation3], %s187
        %s189 = sand.u32 %s29, 1
        %s190 = smul.addr %s189, 8
        %s191 = scalar_lea.vmem [#allocation2], %s190
        %p192 = pneg %p42
        %p193 = pneg %p39
        %p194 = pneg %p63
        %p195 = pneg %p60
        %p196 = pneg %p84
        %p197 = pneg %p81
        %p198 = pneg %p110
        %p199 = pneg %p107
        %s200 = sand.u32 %s97, 1
        %s201 = scalar_lea.sflag [#allocation4], %s200
        %s202 = sand.u32 %s97, 1
        %s203 = smul.addr %s202, 16
        %s204 = scalar_lea.vmem [#allocation7], %s203
        %v206 = vld [vmem:[%s176] sm:$0xff]
        %v207 = vpack.c.bf16 %v206, %v206
        %v208 = vld [vmem:[#allocation5] sm:$0xff]
        %v209 = vld [vmem:[#allocation5 + $0x8] sm:$0xff]
        %v210 = vld [vmem:[#allocation5 + $0x10] sm:$0xff]
        %v211 = vld [vmem:[#allocation5 + $0x18] sm:$0xff]
        %v212 = vld [vmem:[%s2] sm:$0x3]
        %v214 = vperm.slane %v212, 0
        %v215 = vperm.slane %v212, 1
        %v222 = vunpack.c.l.b16 %v208
        %v223 = vunpack.c.h.b16 %v208
        %v224 = vunpack.c.l.b16 %v209
        %v225 = vunpack.c.h.b16 %v209
        %v226 = vunpack.c.l.b16 %v210
        %v227 = vunpack.c.h.b16 %v210
        %v228 = vunpack.c.l.b16 %v211
        %v229 = vunpack.c.h.b16 %v211
        %v230 = vpack.c.b16 %v224, %v222
        %v231 = vpack.c.b16 %v225, %v223
        %v232 = vpack.c.b16 %v228, %v226
        %v233 = vpack.c.b16 %v229, %v227
        %vm238 = vcmask 261120
        %v240 = vsel %vm238, %v207, 0
        %242 = vmatpush.bf16.msra.mxu0 0
        %243 = vmatpush.bf16.msra.mxu0 0
        %244 = vmatpush.bf16.msra.mxu0 0
        %245 = vmatpush.bf16.msra.mxu0 0
        %246 = vmatpush.bf16.msra.mxu0 0
        %247 = vmatpush.bf16.msra.mxu0 0
        %248 = vmatpush.bf16.msra.mxu0 %v232
        %249 = vmatpush.bf16.msra.mxu0 %v230
        %250 = vmatmul.bf16.gmra.mxu0 %v240
        %v251 = vpop.f32.mrf.mxu0
        %v252 = vadd.f32 %v214, %v251
        %v253 = vpop.f32.mrf.mxu0
        %254 = vdwg.mxu0
        %255 = vmatpush.bf16.msra.mxu0 0
        %256 = vmatpush.bf16.msra.mxu0 0
        %257 = vmatpush.bf16.msra.mxu0 0
        %258 = vmatpush.bf16.msra.mxu0 0
        %259 = vmatpush.bf16.msra.mxu0 0
        %260 = vmatpush.bf16.msra.mxu0 0
        %261 = vmatpush.bf16.msra.mxu0 %v233
        %262 = vmatpush.bf16.msra.mxu0 %v231
        %263 = vmatmul.bf16.gmra.mxu0 %v240
        %v264 = vpop.f32.mrf.mxu0
        %v265 = vadd.f32 %v215, %v264
        %v266 = vpop.f32.mrf.mxu0
        %267 = vdwg.mxu0
        %268 = vst [vmem:[%s204] sm:$0xff] %v252
        %269 = vst [vmem:[%s204 + $0x8] sm:$0xff] %v265
        %s270 = sand.u32 %s97, 1
        %s271 = scalar_lea.sflag [#allocation4], %s270
        %s272 = sand.u32 %s97, 1
        %s273 = smul.addr %s272, 16
        %s274 = scalar_lea.vmem [#allocation7], %s273
        // Predicated region
        $region41: #{a_call__.1} parent=31 // pred_check
          %p275 = pneg %p107
        $region42: #{a_call__.1} parent=31 // pred_check_branch
          %277 = sbr.rel (%p275) target = $region44
        $region43: #{a_call__.1} parent=31 // pred_region
          %279 = vsyncadd %s271, 0
          %s280 = smul.addr %s21, 2
          %s281 = smul.addr %s280, 8
          %s282 = scalar_lea.hbm %s3, %s281
          %s284 = sshll.u32 %s274, 4
          %s285 = int_to_ptr.vmem [resolvable:$true] %s284
          %s286 = sshll.u32 %s282, 4
          %s287 = int_to_ptr.hbm [resolvable:$true] %s286
          %289 = dma.vmem_to_hbm [thread:$0]  %s285, 256, %s287, %s271
        $region44: #{a_call__.1} parent=31 // pred_fallthru
          _
      $region32: #{a_call__.1} parent=5 // pred_fallthru
        _
      %p290 = scmp.le.s32.totalorder 2, %s16
      // Predicated region
      $region45: #{a_call__.1} parent=5 // pred_check
        %p291 = pneg %p290
      $region46: #{a_call__.1} parent=5 // pred_check_branch
        %293 = sbr.rel (%p291) target = $region48
      $region47: #{a_call__.1} parent=5 // pred_region
        %s294 = ssub.s32 %s16, 2
        // Predicated region
        $region49: #{a_call__.1} parent=47 // pred_check
          %p295 = pneg %p113
        $region50: #{a_call__.1} parent=47 // pred_check_branch
          %297 = sbr.rel (%p295) target = $region52
        $region51: #{a_call__.1} parent=47 // pred_region
          %s298 = sand.u32 %s98, 1
          %s299 = scalar_lea.sflag [#allocation4], %s298
          %s300 = sand.u32 %s98, 1
          %s301 = smul.addr %s300, 16
          %s302 = scalar_lea.vmem [#allocation7], %s301
          %304 = dma.done %s299, 256
        $region52: #{a_call__.1} parent=47 // pred_fallthru
          _
      $region48: #{a_call__.1} parent=5 // pred_fallthru
        _
    $region6: #{a_call__.1} parent=1 // loop_footer
      %s20 = sadd.s32 1, %s16
    $region7: #{a_call__.1} parent=1 // loop_footer_branch
      %15 = sbr.rel target = $region3
    $region8: #{a_call__.1} parent=1 // loop_exit
      _
    %305 = vsyncpa [#allocation3], 1
    %s306 = scalar_lea.sflag [#allocation3], 1
    %307 = vsyncpa %s306, 1
    %308 = vsyncpa [#allocation6], 1
    %309 = vsyncpa [#allocation4], 1
    %s310 = scalar_lea.sflag [#allocation4], 1
    %311 = vsyncpa %s310, 1

</llo_original>
